<compile_context>
chip_gen: v7x
topology: tpu7x:2x2x1
jax: 0.10.0
libtpu: 0.0.40
codegen_flags: <defaults>
</compile_context>

<pallas_src>
import jax
import jax.numpy as jnp
from jax import lax
from jax.experimental import pallas as pl
from jax.experimental.pallas import tpu as pltpu


def _gelu_exact(x):
    # Matches torch.nn.functional.gelu default (approximate='none'): x * Phi(x).
    inv_sqrt2 = jnp.asarray(0.7071067811865476, dtype=x.dtype)
    return 0.5 * x * (1.0 + lax.erf(x * inv_sqrt2))


def _round_up(v, m):
    return ((v + m - 1) // m) * m


def probed_ffn_kernel(x_ref, w_in_ref, b_in_ref,
                      w_hid_ref, b_hid_ref,
                      w_out_ref, b_out_ref,
                      y_ref, probe_ref,
                      h_ref):
    # Grid = (batch_tiles, n_layers + 1).  For layer step l:
    #   l == 0        -> in_layer + GELU            -> probe block 0
    #   l in [1, L]   -> hidden layer (l-1) + GELU  -> probe block l
    #   l == L (last) -> additionally out_layer     -> y
    #
    # x_ref     : (tile_b, in_pad)    f32
    # w_in_ref  : (in_pad, d_pad)     bf16     b_in_ref  : (1, d_pad)   f32
    # w_hid_ref : (d_pad, d_pad)      bf16 (layer dim squeezed, streamed)
    # b_hid_ref : (1, d_pad)          f32  (layer dim squeezed, streamed)
    # w_out_ref : (d_pad, out_pad)    bf16     b_out_ref : (1, out_pad) f32
    # y_ref     : (tile_b, out_pad)   f32  (resident over layer axis)
    # probe_ref : (tile_b, d_pad)     f32  (one lane-dense block per step)
    # h_ref     : (tile_b, d_pad)     f32  VMEM scratch carried across layer steps
    l = pl.program_id(1)
    last = pl.num_programs(1) - 1

    @pl.when(l == 0)
    def _():
        h = (jnp.dot(x_ref[...], w_in_ref[...].astype(jnp.float32),
                     preferred_element_type=jnp.float32)
             + b_in_ref[...])
        h_ref[...] = _gelu_exact(h)

    @pl.when(l > 0)
    def _():
        h = (jnp.dot(h_ref[...], w_hid_ref[...].astype(jnp.float32),
                     preferred_element_type=jnp.float32)
             + b_hid_ref[...])
        h_ref[...] = _gelu_exact(h)

    # Post-GELU activation of this step -> probe block l (lane-dense tile write).
    probe_ref[...] = h_ref[...]

    @pl.when(l == last)
    def _():
        y_ref[...] = (jnp.dot(h_ref[...], w_out_ref[...].astype(jnp.float32),
                              preferred_element_type=jnp.float32)
                      + b_out_ref[...])


def prepare_params(params, *, lane=128):
    """One-time conversion from PyTorch nn.Linear layout to kernel layout.

    Transposes weights to (in, out), zero-pads every feature dim to a multiple of
    128 (lane-dense stores, aligned DMAs), and casts weights to bfloat16.  Biases
    stay f32.  Call ONCE at load time — never per forward call.
    """
    w_in = jnp.asarray(params["in_layer.weight"], jnp.float32)     # (d, n_in)
    b_in = jnp.asarray(params["in_layer.bias"], jnp.float32)       # (d,)
    w_hid = jnp.asarray(params["layers.weight"], jnp.float32)      # (L, d, d)
    b_hid = jnp.asarray(params["layers.bias"], jnp.float32)        # (L, d)
    w_out = jnp.asarray(params["out_layer.weight"], jnp.float32)   # (n_out, d)
    b_out = jnp.asarray(params["out_layer.bias"], jnp.float32)     # (n_out,)

    n_layers, d_model, _ = w_hid.shape
    n_inputs = w_in.shape[1]
    n_outputs = w_out.shape[0]

    d_pad = _round_up(d_model, lane)
    in_pad = _round_up(n_inputs, lane)
    out_pad = _round_up(n_outputs, lane)

    def pad2(a, rows, cols):
        return jnp.pad(a, ((0, rows - a.shape[0]), (0, cols - a.shape[1])))

    return {
        "w_in": pad2(w_in.T, in_pad, d_pad).astype(jnp.bfloat16),          # (in_pad, d_pad)
        "b_in": jnp.pad(b_in, (0, d_pad - d_model)).reshape(1, d_pad),
        "w_hid": jnp.pad(jnp.transpose(w_hid, (0, 2, 1)),
                         ((0, 0), (0, d_pad - d_model), (0, d_pad - d_model))
                         ).astype(jnp.bfloat16),                           # (L, d_pad, d_pad)
        "b_hid": jnp.pad(b_hid, ((0, 0), (0, d_pad - d_model))
                         ).reshape(n_layers, 1, d_pad),
        "w_out": pad2(w_out.T, d_pad, out_pad).astype(jnp.bfloat16),       # (d_pad, out_pad)
        "b_out": jnp.pad(b_out, (0, out_pad - n_outputs)).reshape(1, out_pad),
    }


def probed_feed_forward(x, prep, dims):
    """Forward pass.  `prep` from prepare_params(); `dims` is the STATIC tuple
    (n_layers, n_inputs, d_model, n_outputs).

    x: (n_inputs,)   -> unbatched (PyTorch module semantics); returns
                        y (n_outputs,), probe (n_layers+1, d_model)
    x: (B, n_inputs) -> batched GEMM path; returns
                        y (B, n_outputs), probe (n_layers+1, B, d_model)
    """
    n_layers, n_inputs, d_model, n_outputs = dims
    w_in, b_in = prep["w_in"], prep["b_in"]
    w_hid, b_hid = prep["w_hid"], prep["b_hid"]
    w_out, b_out = prep["w_out"], prep["b_out"]

    in_pad, d_pad = w_in.shape
    out_pad = w_out.shape[1]
    assert n_layers >= 1, "streamed kernel expects at least one hidden layer"
    n_steps = n_layers + 1

    squeeze = (x.ndim == 1)
    x2 = x.reshape(1, n_inputs) if squeeze else x
    batch = x2.shape[0]

    # Batch tiling: multiple of 8 (f32 sublane); <=128-row tiles.
    if batch <= 128:
        b_padded = _round_up(batch, 8)
        tile_b = b_padded
    else:
        b_padded = _round_up(batch, 128)
        tile_b = 128
    n_b_tiles = b_padded // tile_b

    x_pad = jnp.zeros((b_padded, in_pad), jnp.float32)
    x_pad = x_pad.at[:batch, :n_inputs].set(x2.astype(jnp.float32))

    # Hidden layer used at step l is (l - 1); step 0 just prefetches layer 0
    # (same block index as step 1, so no redundant DMA is issued).
    hid_idx = lambda b, l: (jnp.maximum(l - 1, 0), 0, 0)

    # --- Explicit VMEM budget (review item). 2x = default double-buffering; ----
    # --- w_hid/b_hid pipeline depth is intentionally left at the default 2. ----
    bf16, f32 = 2, 4
    vmem_bytes = 2 * (d_pad * d_pad * bf16 + d_pad * f32)              # streamed w_hid / b_hid
    vmem_bytes += 2 * (in_pad * d_pad * bf16 + d_pad * f32             # resident w_in / b_in
                       + d_pad * out_pad * bf16 + out_pad * f32        # resident w_out / b_out
                       + tile_b * in_pad * f32                         # x block
                       + tile_b * out_pad * f32                        # y block
                       + tile_b * d_pad * f32)                         # probe block
    vmem_bytes += tile_b * d_pad * f32                                 # carried-h scratch
    vmem_bytes = int(min(max(vmem_bytes + (4 << 20), 32 << 20), 127 << 20))

    cost = pl.CostEstimate(
        flops=int(2 * b_padded * (in_pad * d_pad + n_layers * d_pad * d_pad
                                  + d_pad * out_pad)),
        transcendentals=int(b_padded * d_pad * n_steps),
        bytes_accessed=int((in_pad * d_pad + n_layers * d_pad * d_pad
                            + d_pad * out_pad) * bf16
                           + ((n_layers + 1) * d_pad + out_pad) * f32
                           + b_padded * (in_pad + out_pad + n_steps * d_pad) * f32),
    )

    y_pad, probe_pad = pl.pallas_call(
        probed_ffn_kernel,
        grid=(n_b_tiles, n_steps),
        in_specs=[
            pl.BlockSpec((tile_b, in_pad), lambda b, l: (b, 0)),           # x (per batch tile)
            pl.BlockSpec((in_pad, d_pad), lambda b, l: (0, 0)),            # w_in (resident)
            pl.BlockSpec((1, d_pad), lambda b, l: (0, 0)),                 # b_in (resident)
            pl.BlockSpec((None, d_pad, d_pad), hid_idx),                   # w_hid (streamed)
            pl.BlockSpec((None, 1, d_pad), hid_idx),                       # b_hid (streamed)
            pl.BlockSpec((d_pad, out_pad), lambda b, l: (0, 0)),           # w_out (resident)
            pl.BlockSpec((1, out_pad), lambda b, l: (0, 0)),               # b_out (resident)
        ],
        out_specs=(
            pl.BlockSpec((tile_b, out_pad), lambda b, l: (b, 0)),          # y (resident over l)
            pl.BlockSpec((None, tile_b, d_pad), lambda b, l: (l, b, 0)),   # probe block per step
        ),
        out_shape=(
            jax.ShapeDtypeStruct((b_padded, out_pad), jnp.float32),
            jax.ShapeDtypeStruct((n_steps, b_padded, d_pad), jnp.float32),
        ),
        scratch_shapes=[pltpu.VMEM((tile_b, d_pad), jnp.float32)],         # carried activation h
        compiler_params=pltpu.CompilerParams(
            dimension_semantics=("parallel", "arbitrary"),
            vmem_limit_bytes=vmem_bytes),
        cost_estimate=cost,
    )(x_pad, w_in, b_in, w_hid, b_hid, w_out, b_out)

    y = y_pad[:batch, :n_outputs]
    probe = probe_pad[:, :batch, :d_model]
    if squeeze:
        return y[0], probe[:, 0, :]
    return y, probe


def init_params(key, n_layers, n_inputs, d_model, n_outputs):
    """Deterministic init mimicking PyTorch nn.Linear (U(-1/sqrt(fan_in), 1/sqrt(fan_in)))."""
    ks = jax.random.split(key, 6)

    def uni(k, shape, fan_in):
        bound = 1.0 / jnp.sqrt(jnp.asarray(fan_in, jnp.float32))
        return jax.random.uniform(k, shape, jnp.float32, -bound, bound)

    return {
        "in_layer.weight": uni(ks[0], (d_model, n_inputs), n_inputs),
        "in_layer.bias": uni(ks[1], (d_model,), n_inputs),
        "layers.weight": uni(ks[2], (n_layers, d_model, d_model), d_model),
        "layers.bias": uni(ks[3], (n_layers, d_model), d_model),
        "out_layer.weight": uni(ks[4], (n_outputs, d_model), d_model),
        "out_layer.bias": uni(ks[5], (n_outputs,), d_model),
    }


def probed_feed_forward_ref(x, params):
    """Pure-JAX f32 reference matching the PyTorch forward (works for 1-D or 2-D x)."""
    w_in, b_in = params["in_layer.weight"], params["in_layer.bias"]
    w_hid, b_hid = params["layers.weight"], params["layers.bias"]
    w_out, b_out = params["out_layer.weight"], params["out_layer.bias"]

    h = _gelu_exact(x @ w_in.T + b_in)
    rows = [h]
    for i in range(w_hid.shape[0]):
        h = _gelu_exact(h @ w_hid[i].T + b_hid[i])
        rows.append(h)
    y = h @ w_out.T + b_out
    return y, jnp.stack(rows, axis=0)


if __name__ == "__main__":
    key = jax.random.PRNGKey(0)
    k_p1, k_x1, k_p2, k_x2 = jax.random.split(key, 4)

    fwd = jax.jit(probed_feed_forward, static_argnums=2)

    # Case 1: unbatched, unaligned dims — exact PyTorch-module semantics.
    n_layers, n_inputs, d_model, n_outputs = 3, 16, 32, 8
    params = init_params(k_p1, n_layers, n_inputs, d_model, n_outputs)
    x = jax.random.normal(k_x1, (n_inputs,), dtype=jnp.float32)
    prep = prepare_params(params)                       # one-time transpose/pad/bf16 cast
    dims = (n_layers, n_inputs, d_model, n_outputs)

    y, probe = fwd(x, prep, dims)
    jax.block_until_ready((y, probe))
    y_ref, probe_exp = probed_feed_forward_ref(x, params)
    assert y.shape == (n_outputs,) and probe.shape == (n_layers + 1, d_model)
    assert jnp.allclose(y, y_ref, rtol=2e-2, atol=2e-2)
    assert jnp.allclose(probe, probe_exp, rtol=2e-2, atol=2e-2)

    # Case 2: batched, 128-aligned dims — GEMM path (lane-dense, unmasked stores).
    n_layers2, n_inputs2, d_model2, n_outputs2, B = 2, 128, 128, 128, 16
    params2 = init_params(k_p2, n_layers2, n_inputs2, d_model2, n_outputs2)
    xb = jax.random.normal(k_x2, (B, n_inputs2), dtype=jnp.float32)
    prep2 = prepare_params(params2)
    dims2 = (n_layers2, n_inputs2, d_model2, n_outputs2)

    yb, probeb = fwd(xb, prep2, dims2)
    jax.block_until_ready((yb, probeb))
    yb_ref, probeb_exp = probed_feed_forward_ref(xb, params2)
    assert yb.shape == (B, n_outputs2) and probeb.shape == (n_layers2 + 1, B, d_model2)
    assert jnp.allclose(yb, yb_ref, rtol=2e-2, atol=2e-2)
    assert jnp.allclose(probeb, probeb_exp, rtol=2e-2, atol=2e-2)

    print("KERNEL_OK")
</pallas_src>

<mosaic_0001>
module attributes {stable_mosaic.version = 11 : i64} {
  func.func @probed_ffn_kernel(%arg0: i32, %arg1: i32, %arg2: memref<8x128xf32, #tpu.memory_space<vmem>>, %arg3: memref<128x128xbf16, #tpu.memory_space<vmem>>, %arg4: memref<1x128xf32, #tpu.memory_space<vmem>>, %arg5: memref<1x128x128xbf16, #tpu.memory_space<vmem>>, %arg6: memref<1x1x128xf32, #tpu.memory_space<vmem>>, %arg7: memref<128x128xbf16, #tpu.memory_space<vmem>>, %arg8: memref<1x128xf32, #tpu.memory_space<vmem>>, %arg9: memref<8x128xf32, #tpu.memory_space<vmem>>, %arg10: memref<1x8x128xf32, #tpu.memory_space<vmem>>, %arg11: memref<8x128xf32, #tpu.memory_space<vmem>>) attributes {dimension_semantics = [#tpu.dimension_semantics<parallel>, #tpu.dimension_semantics<arbitrary>], iteration_bounds = array<i64: 1, 4>, scalar_prefetch = 0 : i64, scratch_operands = 1 : i64, tpu.core_type = #tpu.core_type<tc>, window_params = [{transform_indices = @transform_0, window_bounds = array<i64: 8, 128>}, {pipeline_mode = #tpu.pipeline_mode<synchronous>, transform_indices = @transform_1, window_bounds = array<i64: 128, 128>}, {pipeline_mode = #tpu.pipeline_mode<synchronous>, transform_indices = @transform_2, window_bounds = array<i64: 1, 128>}, {transform_indices = @transform_3, window_bounds = array<i64: 1, 128, 128>}, {transform_indices = @transform_4, window_bounds = array<i64: 1, 1, 128>}, {pipeline_mode = #tpu.pipeline_mode<synchronous>, transform_indices = @transform_5, window_bounds = array<i64: 128, 128>}, {pipeline_mode = #tpu.pipeline_mode<synchronous>, transform_indices = @transform_6, window_bounds = array<i64: 1, 128>}, {transform_indices = @transform_7, window_bounds = array<i64: 8, 128>}, {transform_indices = @transform_8, window_bounds = array<i64: 1, 8, 128>}]} {
    %c0_i32 = arith.constant 0 : i32
    %0 = arith.cmpi eq, %arg1, %c0_i32 : i32
    %1 = arith.extui %0 : i1 to i32
    %c0_i32_0 = arith.constant 0 : i32
    %2 = arith.cmpi ne, %1, %c0_i32_0 : i32
    scf.if %2 {
      %c0_8 = arith.constant 0 : index
      %c0_9 = arith.constant 0 : index
      %13 = vector.load %arg2[%c0_8, %c0_9] : memref<8x128xf32, #tpu.memory_space<vmem>>, vector<8x128xf32>
      %c0_10 = arith.constant 0 : index
      %c0_11 = arith.constant 0 : index
      %14 = vector.load %arg3[%c0_10, %c0_11] : memref<128x128xbf16, #tpu.memory_space<vmem>>, vector<128x128xbf16>
      %15 = arith.extf %14 : vector<128x128xbf16> to vector<128x128xf32>
      %cst = arith.constant dense<0.000000e+00> : vector<8x128xf32>
      %16 = tpu.matmul %13, %15, %cst {dimension_numbers = #tpu.dot_dimension_numbers<[1], [0], [0], [1], [0, 0, 1, 1], [], []>} : vector<8x128xf32>, vector<128x128xf32>, vector<8x128xf32> -> vector<8x128xf32>
      %c0_12 = arith.constant 0 : index
      %c0_13 = arith.constant 0 : index
      %17 = vector.load %arg4[%c0_12, %c0_13] : memref<1x128xf32, #tpu.memory_space<vmem>>, vector<1x128xf32>
      %18 = vector.broadcast %17 : vector<1x128xf32> to vector<8x128xf32>
      %19 = arith.addf %16, %18 : vector<8x128xf32>
      %cst_14 = arith.constant 5.000000e-01 : f32
      %20 = vector.broadcast %cst_14 : f32 to vector<8x128xf32>
      %21 = arith.mulf %20, %19 : vector<8x128xf32>
      %cst_15 = arith.constant 0.707106769 : f32
      %22 = vector.broadcast %cst_15 : f32 to vector<8x128xf32>
      %23 = arith.mulf %19, %22 : vector<8x128xf32>
      %24 = math.erf %23 : vector<8x128xf32>
      %cst_16 = arith.constant 1.000000e+00 : f32
      %25 = vector.broadcast %cst_16 : f32 to vector<8x128xf32>
      %26 = arith.addf %25, %24 : vector<8x128xf32>
      %27 = arith.mulf %21, %26 : vector<8x128xf32>
      %c0_17 = arith.constant 0 : index
      %c0_18 = arith.constant 0 : index
      %28 = vector.load %arg11[%c0_17, %c0_18] : memref<8x128xf32, #tpu.memory_space<vmem>>, vector<8x128xf32>
      tpu.vector_store %arg11[%c0_17, %c0_18], %27 {strides = array<i32>} : memref<8x128xf32, #tpu.memory_space<vmem>>, vector<8x128xf32>,
    } else {
    }
    %c0_i32_1 = arith.constant 0 : i32
    %3 = arith.cmpi sgt, %arg1, %c0_i32_1 : i32
    %4 = arith.extui %3 : i1 to i32
    %c0_i32_2 = arith.constant 0 : i32
    %5 = arith.cmpi ne, %4, %c0_i32_2 : i32
    scf.if %5 {
      %c0_8 = arith.constant 0 : index
      %c0_9 = arith.constant 0 : index
      %13 = vector.load %arg11[%c0_8, %c0_9] : memref<8x128xf32, #tpu.memory_space<vmem>>, vector<8x128xf32>
      %c0_10 = arith.constant 0 : index
      %c0_11 = arith.constant 0 : index
      %c0_12 = arith.constant 0 : index
      %14 = vector.load %arg5[%c0_10, %c0_11, %c0_12] : memref<1x128x128xbf16, #tpu.memory_space<vmem>>, vector<1x128x128xbf16>
      %15 = vector.shape_cast %14 : vector<1x128x128xbf16> to vector<128x128xbf16>
      %16 = arith.extf %15 : vector<128x128xbf16> to vector<128x128xf32>
      %cst = arith.constant dense<0.000000e+00> : vector<8x128xf32>
      %17 = tpu.matmul %13, %16, %cst {dimension_numbers = #tpu.dot_dimension_numbers<[1], [0], [0], [1], [0, 0, 1, 1], [], []>} : vector<8x128xf32>, vector<128x128xf32>, vector<8x128xf32> -> vector<8x128xf32>
      %c0_13 = arith.constant 0 : index
      %c0_14 = arith.constant 0 : index
      %c0_15 = arith.constant 0 : index
      %18 = vector.load %arg6[%c0_13, %c0_14, %c0_15] : memref<1x1x128xf32, #tpu.memory_space<vmem>>, vector<1x1x128xf32>
      %19 = vector.shape_cast %18 : vector<1x1x128xf32> to vector<1x128xf32>
      %20 = vector.broadcast %19 : vector<1x128xf32> to vector<8x128xf32>
      %21 = arith.addf %17, %20 : vector<8x128xf32>
      %cst_16 = arith.constant 5.000000e-01 : f32
      %22 = vector.broadcast %cst_16 : f32 to vector<8x128xf32>
      %23 = arith.mulf %22, %21 : vector<8x128xf32>
      %cst_17 = arith.constant 0.707106769 : f32
      %24 = vector.broadcast %cst_17 : f32 to vector<8x128xf32>
      %25 = arith.mulf %21, %24 : vector<8x128xf32>
      %26 = math.erf %25 : vector<8x128xf32>
      %cst_18 = arith.constant 1.000000e+00 : f32
      %27 = vector.broadcast %cst_18 : f32 to vector<8x128xf32>
      %28 = arith.addf %27, %26 : vector<8x128xf32>
      %29 = arith.mulf %23, %28 : vector<8x128xf32>
      %c0_19 = arith.constant 0 : index
      %c0_20 = arith.constant 0 : index
      %30 = vector.load %arg11[%c0_19, %c0_20] : memref<8x128xf32, #tpu.memory_space<vmem>>, vector<8x128xf32>
      tpu.vector_store %arg11[%c0_19, %c0_20], %29 {strides = array<i32>} : memref<8x128xf32, #tpu.memory_space<vmem>>, vector<8x128xf32>,
    } else {
    }
    %c0 = arith.constant 0 : index
    %c0_3 = arith.constant 0 : index
    %6 = vector.load %arg11[%c0, %c0_3] : memref<8x128xf32, #tpu.memory_space<vmem>>, vector<8x128xf32>
    %c0_4 = arith.constant 0 : index
    %c0_5 = arith.constant 0 : index
    %c0_6 = arith.constant 0 : index
    %7 = vector.load %arg10[%c0_4, %c0_5, %c0_6] : memref<1x8x128xf32, #tpu.memory_space<vmem>>, vector<1x8x128xf32>
    %8 = vector.shape_cast %7 : vector<1x8x128xf32> to vector<8x128xf32>
    %9 = vector.shape_cast %6 : vector<8x128xf32> to vector<1x8x128xf32>
    tpu.vector_store %arg10[%c0_4, %c0_5, %c0_6], %9 {strides = array<i32>} : memref<1x8x128xf32, #tpu.memory_space<vmem>>, vector<1x8x128xf32>,
    %c3_i32 = arith.constant 3 : i32
    %10 = arith.cmpi eq, %arg1, %c3_i32 : i32
    %11 = arith.extui %10 : i1 to i32
    %c0_i32_7 = arith.constant 0 : i32
    %12 = arith.cmpi ne, %11, %c0_i32_7 : i32
    scf.if %12 {
      %c0_8 = arith.constant 0 : index
      %c0_9 = arith.constant 0 : index
      %13 = vector.load %arg11[%c0_8, %c0_9] : memref<8x128xf32, #tpu.memory_space<vmem>>, vector<8x128xf32>
      %c0_10 = arith.constant 0 : index
      %c0_11 = arith.constant 0 : index
      %14 = vector.load %arg7[%c0_10, %c0_11] : memref<128x128xbf16, #tpu.memory_space<vmem>>, vector<128x128xbf16>
      %15 = arith.extf %14 : vector<128x128xbf16> to vector<128x128xf32>
      %cst = arith.constant dense<0.000000e+00> : vector<8x128xf32>
      %16 = tpu.matmul %13, %15, %cst {dimension_numbers = #tpu.dot_dimension_numbers<[1], [0], [0], [1], [0, 0, 1, 1], [], []>} : vector<8x128xf32>, vector<128x128xf32>, vector<8x128xf32> -> vector<8x128xf32>
      %c0_12 = arith.constant 0 : index
      %c0_13 = arith.constant 0 : index
      %17 = vector.load %arg8[%c0_12, %c0_13] : memref<1x128xf32, #tpu.memory_space<vmem>>, vector<1x128xf32>
      %18 = vector.broadcast %17 : vector<1x128xf32> to vector<8x128xf32>
      %19 = arith.addf %16, %18 : vector<8x128xf32>
      %c0_14 = arith.constant 0 : index
      %c0_15 = arith.constant 0 : index
      %20 = vector.load %arg9[%c0_14, %c0_15] : memref<8x128xf32, #tpu.memory_space<vmem>>, vector<8x128xf32>
      tpu.vector_store %arg9[%c0_14, %c0_15], %19 {strides = array<i32>} : memref<8x128xf32, #tpu.memory_space<vmem>>, vector<8x128xf32>,
    } else {
    }
    return
  }
  func.func @transform_0(%arg0: i32, %arg1: i32) -> (i32, i32) {
    %c0_i32 = arith.constant 0 : i32
    %c0_i32_0 = arith.constant 0 : i32
    return %arg0, %c0_i32 : i32, i32
  }
  func.func @transform_1(%arg0: i32, %arg1: i32) -> (i32, i32) {
    %c0_i32 = arith.constant 0 : i32
    %c0_i32_0 = arith.constant 0 : i32
    %c0_i32_1 = arith.constant 0 : i32
    return %c0_i32, %c0_i32_0 : i32, i32
  }
  func.func @transform_2(%arg0: i32, %arg1: i32) -> (i32, i32) {
    %c0_i32 = arith.constant 0 : i32
    %c0_i32_0 = arith.constant 0 : i32
    %c0_i32_1 = arith.constant 0 : i32
    return %c0_i32, %c0_i32_0 : i32, i32
  }
  func.func @transform_3(%arg0: i32, %arg1: i32) -> (i32, i32, i32) {
    %c1_i32 = arith.constant 1 : i32
    %0 = arith.subi %arg1, %c1_i32 : i32
    %c0_i32 = arith.constant 0 : i32
    %1 = arith.maxsi %0, %c0_i32 : i32
    %c0_i32_0 = arith.constant 0 : i32
    %c0_i32_1 = arith.constant 0 : i32
    %c0_i32_2 = arith.constant 0 : i32
    return %1, %c0_i32_0, %c0_i32_1 : i32, i32, i32
  }
  func.func @transform_4(%arg0: i32, %arg1: i32) -> (i32, i32, i32) {
    %c1_i32 = arith.constant 1 : i32
    %0 = arith.subi %arg1, %c1_i32 : i32
    %c0_i32 = arith.constant 0 : i32
    %1 = arith.maxsi %0, %c0_i32 : i32
    %c0_i32_0 = arith.constant 0 : i32
    %c0_i32_1 = arith.constant 0 : i32
    %c0_i32_2 = arith.constant 0 : i32
    return %1, %c0_i32_0, %c0_i32_1 : i32, i32, i32
  }
  func.func @transform_5(%arg0: i32, %arg1: i32) -> (i32, i32) {
    %c0_i32 = arith.constant 0 : i32
    %c0_i32_0 = arith.constant 0 : i32
    %c0_i32_1 = arith.constant 0 : i32
    return %c0_i32, %c0_i32_0 : i32, i32
  }
  func.func @transform_6(%arg0: i32, %arg1: i32) -> (i32, i32) {
    %c0_i32 = arith.constant 0 : i32
    %c0_i32_0 = arith.constant 0 : i32
    %c0_i32_1 = arith.constant 0 : i32
    return %c0_i32, %c0_i32_0 : i32, i32
  }
  func.func @transform_7(%arg0: i32, %arg1: i32) -> (i32, i32) {
    %c0_i32 = arith.constant 0 : i32
    %c0_i32_0 = arith.constant 0 : i32
    return %arg0, %c0_i32 : i32, i32
  }
  func.func @transform_8(%arg0: i32, %arg1: i32) -> (i32, i32, i32) {
    %c0_i32 = arith.constant 0 : i32
    %c0_i32_0 = arith.constant 0 : i32
    return %arg1, %arg0, %c0_i32 : i32, i32, i32
  }
}

</mosaic_0001>

<llo_original>
// kernel: probed_feed_forward.1
$region0: #{probed_feed_forward.1}
  #allocation0 [shape = 'u32[]', space=smem, size = 0x4, offset = 0x4, fixed_abs, tag = 'smem constant byte address 0x4 - core index']
  #allocation1 [shape = 'u32[144,128]{1,0:T(1,128)}', space=vmem, size = 0x12000, scoped, tag = 'internal scratch']
  #allocation2 [shape = 'f32[8,128]{1,0:T(8,128)}', space=vmem, size = 0x1000, scoped, tag = 'scratch operand']
  %s0 = inlined_call_operand.vmem [shape: f32[8,128], index: 0, kind: input, shape index: {}]
  %s1 = inlined_call_operand.hbm [shape: bf16[128,128], index: 1, kind: input, shape index: {}]
  %s2 = inlined_call_operand.vmem [shape: f32[1,128], index: 2, kind: input, shape index: {}]
  %s3 = inlined_call_operand.hbm [shape: bf16[3,128,128], index: 3, kind: input, shape index: {}]
  %s4 = inlined_call_operand.vmem [shape: f32[3,1,128], index: 4, kind: input, shape index: {}]
  %s5 = inlined_call_operand.hbm [shape: bf16[128,128], index: 5, kind: input, shape index: {}]
  %s6 = inlined_call_operand.vmem [shape: f32[1,128], index: 6, kind: input, shape index: {}]
  %s7 = inlined_call_operand.vmem [shape: f32[8,128], index: 7, kind: output, shape index: {0}]
  %s8 = inlined_call_operand.vmem [shape: f32[4,8,128], index: 8, kind: output, shape index: {1}]
  %9 = xla_tuple %s7, %s8
  %s10 = sld [smem:[#allocation0]]
  $region93: #{probed_feed_forward.1} parent=0
    _
  %s12 = ssub.s32 1, %s10
  %s13 = scalar_select 0, %s12, %s10
  $region1: #{probed_feed_forward.1} parent=0
    #allocation3 [shape = 'u8[32768]{0}', space=vmem, size = 0x8000, scoped, tag = 'input window, operand 1, single buffered']
    #allocation4 [shape = 's32[2]{0}', space=sflag, size = 0x8, scoped, tag = 'scoped memory for probed_feed_forward.1']
    #allocation5 [shape = 'u8[65536]{0}', space=vmem, size = 0x10000, scoped, tag = 'input window, operand 3']
    #allocation6 [shape = 's32[2]{0}', space=sflag, size = 0x8, scoped, tag = 'scoped memory for probed_feed_forward.1']
    #allocation7 [shape = 'u8[32768]{0}', space=vmem, size = 0x8000, scoped, tag = 'input window, operand 5, single buffered']
    %14 = vsyncpa [#allocation4], 0
    %15 = vsyncpa [#allocation6], 0
    %s16 = scalar_lea.sflag [#allocation6], 1
    %17 = vsyncpa %s16, 0
    loop: start=0, step=1, limit=6
    $region2: #{probed_feed_forward.1} parent=1 // loop_pre_header
      _
    $region3: #{probed_feed_forward.1} parent=1 // loop_header
      %s19 = sphi 0, %s23
      %p20 = scmp.ge.s32.totalorder %s19, 6
      %s26 = sphi 0, %s38
      %s27 = sphi 0, %s34
      %s28 = sphi 0, %s26
      %s29 = sphi 0, %s27
      %s30 = sphi 0, %s28
      %s31 = sphi 0, %s29
      %s41 = sphi 0, %s43
      %s44 = sphi 0, %s41
      %s45 = sphi 0, %s44
      %s61 = sphi 0, %s45
      %s65 = sphi 0, %s65
      %s67 = sphi 0, %s65
      %s68 = sphi 0, %s67
      %s82 = sphi 0, %s68
      %s86 = sphi 0, %s86
      %s88 = sphi 0, %s86
      %s89 = sphi 0, %s88
      %s103 = sphi 0, %s89
      %s115 = sphi 0, %s117
      %s118 = sphi 0, %s115
      %s119 = sphi 0, %s118
      %s135 = sphi 0, %s119
      %s147 = sphi 0, %s149
      %s150 = sphi 0, %s147
      %s151 = sphi 0, %s150
      %s167 = sphi 0, %s151
      %s171 = sphi 0, %s171
      %s173 = sphi 0, %s171
      %s174 = sphi 0, %s173
      %s188 = sphi 0, %s174
      %s192 = sphi 0, %s192
      %s194 = sphi 0, %s192
      %s195 = sphi 0, %s194
      %s209 = sphi 0, %s195
      %s215 = sphi 0, %s217
      %s218 = sphi 0, %s215
      %s219 = sphi 0, %s218
      %s235 = sphi 0, %s219
      %s243 = sphi 0, %s245
      %s246 = sphi 0, %s243
      %s247 = sphi 0, %s246
      %s263 = sphi 0, %s247
    $region4: #{probed_feed_forward.1} parent=1 // loop_header_branch
      %22 = sbr.rel (%p20) target = $region8
    $region5: #{probed_feed_forward.1} parent=1 // loop_body
      %s24 = ssub.s32 %s19, 1
      %s25 = ssub.s32 %s19, 2
      %s32 = sadd.s32 1, %s27
      %p33 = scmp.ge.s32.totalorder %s32, 4
      %s34 = scalar_select %p33, 0, %s32
      %s35 = sadd.s32 1, %s26
      %s36 = scalar_select %p33, %s35, %s26
      %p37 = scmp.ge.s32.totalorder %s36, 1
      %s38 = scalar_select %p37, 0, %s36
      %s39 = ssub.s32 %s26, %s38
      %p40 = scmp.eq.s32.totalorder %s39, 0
      %s42 = sadd.s32 %s41, 1
      %s43 = scalar_select %p40, %s41, %s42
      %p46 = pneg %p40
      %p47 = scmp.eq.s32.totalorder %s19, 3
      %p48 = por %p46, %p47
      %p49 = scmp.ne.s32.totalorder %s41, %s44
      %p50 = scmp.eq.s32.totalorder %s19, 0
      %p51 = por %p49, %p50
      %p52 = scmp.ne.s32.totalorder %s41, %s44
      %p53 = scmp.eq.s32.totalorder %s24, 3
      %p54 = por %p52, %p53
      %p55 = scmp.ne.s32.totalorder %s44, %s45
      %p56 = scmp.eq.s32.totalorder %s24, 0
      %p57 = por %p55, %p56
      %p58 = scmp.ne.s32.totalorder %s44, %s45
      %p59 = scmp.eq.s32.totalorder %s25, 3
      %p60 = por %p58, %p59
      %p62 = scmp.ne.s32.totalorder %s45, %s61
      %p63 = scmp.eq.s32.totalorder %s25, 0
      %p64 = por %p62, %p63
      %s66 = sadd.s32 %s65, 1
      %p69 = scmp.eq.s32.totalorder %s19, 3
      %p70 = scmp.ne.s32.totalorder %s65, %s67
      %p71 = scmp.eq.s32.totalorder %s19, 0
      %p72 = por %p70, %p71
      %p73 = scmp.ne.s32.totalorder %s65, %s67
      %p74 = scmp.eq.s32.totalorder %s24, 3
      %p75 = por %p73, %p74
      %p76 = scmp.ne.s32.totalorder %s67, %s68
      %p77 = scmp.eq.s32.totalorder %s24, 0
      %p78 = por %p76, %p77
      %p79 = scmp.ne.s32.totalorder %s67, %s68
      %p80 = scmp.eq.s32.totalorder %s25, 3
      %p81 = por %p79, %p80
      %p83 = scmp.ne.s32.totalorder %s68, %s82
      %p84 = scmp.eq.s32.totalorder %s25, 0
      %p85 = por %p83, %p84
      %s87 = sadd.s32 %s86, 1
      %p90 = scmp.eq.s32.totalorder %s19, 3
      %p91 = scmp.ne.s32.totalorder %s86, %s88
      %p92 = scmp.eq.s32.totalorder %s19, 0
      %p93 = por %p91, %p92
      %p94 = scmp.ne.s32.totalorder %s86, %s88
      %p95 = scmp.eq.s32.totalorder %s24, 3
      %p96 = por %p94, %p95
      %p97 = scmp.ne.s32.totalorder %s88, %s89
      %p98 = scmp.eq.s32.totalorder %s24, 0
      %p99 = por %p97, %p98
      %p100 = scmp.ne.s32.totalorder %s88, %s89
      %p101 = scmp.eq.s32.totalorder %s25, 3
      %p102 = por %p100, %p101
      %p104 = scmp.ne.s32.totalorder %s89, %s103
      %p105 = scmp.eq.s32.totalorder %s25, 0
      %p106 = por %p104, %p105
      %s107 = ssub.s32 %s27, 1
      %p108 = scmp.gt.s32.totalorder %s107, 0
      %s109 = scalar_select %p108, %s107, 0
      %s110 = ssub.s32 %s34, 1
      %p111 = scmp.gt.s32.totalorder %s110, 0
      %s112 = scalar_select %p111, %s110, 0
      %s113 = ssub.s32 %s109, %s112
      %p114 = scmp.eq.s32.totalorder %s113, 0
      %s116 = sadd.s32 %s115, 1
      %s117 = scalar_select %p114, %s115, %s116
      %p120 = pneg %p114
      %p121 = scmp.eq.s32.totalorder %s19, 3
      %p122 = por %p120, %p121
      %p123 = scmp.ne.s32.totalorder %s115, %s118
      %p124 = scmp.eq.s32.totalorder %s19, 0
      %p125 = por %p123, %p124
      %p126 = scmp.ne.s32.totalorder %s115, %s118
      %p127 = scmp.eq.s32.totalorder %s24, 3
      %p128 = por %p126, %p127
      %p129 = scmp.ne.s32.totalorder %s118, %s119
      %p130 = scmp.eq.s32.totalorder %s24, 0
      %p131 = por %p129, %p130
      %p132 = scmp.ne.s32.totalorder %s118, %s119
      %p133 = scmp.eq.s32.totalorder %s25, 3
      %p134 = por %p132, %p133
      %p136 = scmp.ne.s32.totalorder %s119, %s135
      %p137 = scmp.eq.s32.totalorder %s25, 0
      %p138 = por %p136, %p137
      %s139 = ssub.s32 %s27, 1
      %p140 = scmp.gt.s32.totalorder %s139, 0
      %s141 = scalar_select %p140, %s139, 0
      %s142 = ssub.s32 %s34, 1
      %p143 = scmp.gt.s32.totalorder %s142, 0
      %s144 = scalar_select %p143, %s142, 0
      %s145 = ssub.s32 %s141, %s144
      %p146 = scmp.eq.s32.totalorder %s145, 0
      %s148 = sadd.s32 %s147, 1
      %s149 = scalar_select %p146, %s147, %s148
      %p152 = pneg %p146
      %p153 = scmp.eq.s32.totalorder %s19, 3
      %p154 = por %p152, %p153
      %p155 = scmp.ne.s32.totalorder %s147, %s150
      %p156 = scmp.eq.s32.totalorder %s19, 0
      %p157 = por %p155, %p156
      %p158 = scmp.ne.s32.totalorder %s147, %s150
      %p159 = scmp.eq.s32.totalorder %s24, 3
      %p160 = por %p158, %p159
      %p161 = scmp.ne.s32.totalorder %s150, %s151
      %p162 = scmp.eq.s32.totalorder %s24, 0
      %p163 = por %p161, %p162
      %p164 = scmp.ne.s32.totalorder %s150, %s151
      %p165 = scmp.eq.s32.totalorder %s25, 3
      %p166 = por %p164, %p165
      %p168 = scmp.ne.s32.totalorder %s151, %s167
      %p169 = scmp.eq.s32.totalorder %s25, 0
      %p170 = por %p168, %p169
      %s172 = sadd.s32 %s171, 1
      %p175 = scmp.eq.s32.totalorder %s19, 3
      %p176 = scmp.ne.s32.totalorder %s171, %s173
      %p177 = scmp.eq.s32.totalorder %s19, 0
      %p178 = por %p176, %p177
      %p179 = scmp.ne.s32.totalorder %s171, %s173
      %p180 = scmp.eq.s32.totalorder %s24, 3
      %p181 = por %p179, %p180
      %p182 = scmp.ne.s32.totalorder %s173, %s174
      %p183 = scmp.eq.s32.totalorder %s24, 0
      %p184 = por %p182, %p183
      %p185 = scmp.ne.s32.totalorder %s173, %s174
      %p186 = scmp.eq.s32.totalorder %s25, 3
      %p187 = por %p185, %p186
      %p189 = scmp.ne.s32.totalorder %s174, %s188
      %p190 = scmp.eq.s32.totalorder %s25, 0
      %p191 = por %p189, %p190
      %s193 = sadd.s32 %s192, 1
      %p196 = scmp.eq.s32.totalorder %s19, 3
      %p197 = scmp.ne.s32.totalorder %s192, %s194
      %p198 = scmp.eq.s32.totalorder %s19, 0
      %p199 = por %p197, %p198
      %p200 = scmp.ne.s32.totalorder %s192, %s194
      %p201 = scmp.eq.s32.totalorder %s24, 3
      %p202 = por %p200, %p201
      %p203 = scmp.ne.s32.totalorder %s194, %s195
      %p204 = scmp.eq.s32.totalorder %s24, 0
      %p205 = por %p203, %p204
      %p206 = scmp.ne.s32.totalorder %s194, %s195
      %p207 = scmp.eq.s32.totalorder %s25, 3
      %p208 = por %p206, %p207
      %p210 = scmp.ne.s32.totalorder %s195, %s209
      %p211 = scmp.eq.s32.totalorder %s25, 0
      %p212 = por %p210, %p211
      %s213 = ssub.s32 %s26, %s38
      %p214 = scmp.eq.s32.totalorder %s213, 0
      %s216 = sadd.s32 %s215, 1
      %s217 = scalar_select %p214, %s215, %s216
      %p220 = pneg %p214
      %p221 = scmp.eq.s32.totalorder %s19, 3
      %p222 = por %p220, %p221
      %p223 = scmp.ne.s32.totalorder %s215, %s218
      %p224 = scmp.eq.s32.totalorder %s19, 0
      %p225 = por %p223, %p224
      %p226 = scmp.ne.s32.totalorder %s215, %s218
      %p227 = scmp.eq.s32.totalorder %s24, 3
      %p228 = por %p226, %p227
      %p229 = scmp.ne.s32.totalorder %s218, %s219
      %p230 = scmp.eq.s32.totalorder %s24, 0
      %p231 = por %p229, %p230
      %p232 = scmp.ne.s32.totalorder %s218, %s219
      %p233 = scmp.eq.s32.totalorder %s25, 3
      %p234 = por %p232, %p233
      %p236 = scmp.ne.s32.totalorder %s219, %s235
      %p237 = scmp.eq.s32.totalorder %s25, 0
      %p238 = por %p236, %p237
      %s239 = ssub.s32 %s27, %s34
      %s240 = ssub.s32 %s26, %s38
      %s241 = sor.u32 %s239, %s240
      %p242 = scmp.eq.s32.totalorder %s241, 0
      %s244 = sadd.s32 %s243, 1
      %s245 = scalar_select %p242, %s243, %s244
      %p248 = pneg %p242
      %p249 = scmp.eq.s32.totalorder %s19, 3
      %p250 = por %p248, %p249
      %p251 = scmp.ne.s32.totalorder %s243, %s246
      %p252 = scmp.eq.s32.totalorder %s19, 0
      %p253 = por %p251, %p252
      %p254 = scmp.ne.s32.totalorder %s243, %s246
      %p255 = scmp.eq.s32.totalorder %s24, 3
      %p256 = por %p254, %p255
      %p257 = scmp.ne.s32.totalorder %s246, %s247
      %p258 = scmp.eq.s32.totalorder %s24, 0
      %p259 = por %p257, %p258
      %p260 = scmp.ne.s32.totalorder %s246, %s247
      %p261 = scmp.eq.s32.totalorder %s25, 3
      %p262 = por %p260, %p261
      %p264 = scmp.ne.s32.totalorder %s247, %s263
      %p265 = scmp.eq.s32.totalorder %s25, 0
      %p266 = por %p264, %p265
      %p267 = scmp.le.s32.totalorder 1, %s19
      %p268 = scmp.lt.s32.totalorder %s19, 5
      %p269 = pnand %p267, %p268
      %p270 = pneg %p269
      // Predicated region
      $region9: #{probed_feed_forward.1} parent=5 // pred_check
        _
      $region10: #{probed_feed_forward.1} parent=5 // pred_check_branch
        %272 = sbr.rel (%p269) target = $region12
      $region11: #{probed_feed_forward.1} parent=5 // pred_region
        %s273 = ssub.s32 %s19, 1
        // Predicated region
        $region13: #{probed_feed_forward.1} parent=11 // pred_check
          %p274 = pneg %p57
        $region14: #{probed_feed_forward.1} parent=11 // pred_check_branch
          %276 = sbr.rel (%p274) target = $region16
        $region15: #{probed_feed_forward.1} parent=11 // pred_region
          %p277 = scmp.lt.s32.totalorder %s28, 0
          %s278 = scalar_select %p277, %s28, 0
          %s279 = smul.addr %s278, 8
          %s280 = scalar_lea.vmem %s0, %s279
        $region16: #{probed_feed_forward.1} parent=11 // pred_fallthru
          _
        // Predicated region
        $region17: #{probed_feed_forward.1} parent=11 // pred_check
          %p281 = pneg %p78
        $region18: #{probed_feed_forward.1} parent=11 // pred_check_branch
          %283 = sbr.rel (%p281) target = $region20
        $region19: #{probed_feed_forward.1} parent=11 // pred_region
          %s285 = ssub.s32 1024, 1024
          %286 = vsyncadd [#allocation4], %s285
          %s287 = sshll.u32 [#allocation3], 4
          %s288 = int_to_ptr.vmem [resolvable:$true] %s287
          %293 = dma.hbm_to_vmem [thread:$0]  %s1, 1024, %s288, [#allocation4], 64, 64, 4
        $region20: #{probed_feed_forward.1} parent=11 // pred_fallthru
          _
        // Predicated region
        $region21: #{probed_feed_forward.1} parent=11 // pred_check
          %p294 = pneg %p99
        $region22: #{probed_feed_forward.1} parent=11 // pred_check_branch
          %296 = sbr.rel (%p294) target = $region24
        $region23: #{probed_feed_forward.1} parent=11 // pred_region
          _
        $region24: #{probed_feed_forward.1} parent=11 // pred_fallthru
          _
        // Predicated region
        $region25: #{probed_feed_forward.1} parent=11 // pred_check
          %p297 = pneg %p184
        $region26: #{probed_feed_forward.1} parent=11 // pred_check_branch
          %299 = sbr.rel (%p297) target = $region28
        $region27: #{probed_feed_forward.1} parent=11 // pred_region
          %s301 = ssub.s32 1024, 1024
          %302 = vsyncadd [#allocation6], %s301
          %s303 = sshll.u32 [#allocation7], 4
          %s304 = int_to_ptr.vmem [resolvable:$true] %s303
          %309 = dma.hbm_to_vmem [thread:$0]  %s5, 1024, %s304, [#allocation6], 64, 64, 4
        $region28: #{probed_feed_forward.1} parent=11 // pred_fallthru
          _
        // Predicated region
        $region29: #{probed_feed_forward.1} parent=11 // pred_check
          %p310 = pneg %p205
        $region30: #{probed_feed_forward.1} parent=11 // pred_check_branch
          %312 = sbr.rel (%p310) target = $region32
        $region31: #{probed_feed_forward.1} parent=11 // pred_region
          _
        $region32: #{probed_feed_forward.1} parent=11 // pred_fallthru
          _
      $region12: #{probed_feed_forward.1} parent=5 // pred_fallthru
        _
      %p313 = scmp.lt.s32.totalorder %s19, 4
      // Predicated region
      $region33: #{probed_feed_forward.1} parent=5 // pred_check
        %p314 = pneg %p313
      $region34: #{probed_feed_forward.1} parent=5 // pred_check_branch
        %316 = sbr.rel (%p314) target = $region36
      $region35: #{probed_feed_forward.1} parent=5 // pred_region
        // Predicated region
        $region37: #{probed_feed_forward.1} parent=35 // pred_check
          %p317 = pneg %p125
        $region38: #{probed_feed_forward.1} parent=35 // pred_check_branch
          %319 = sbr.rel (%p317) target = $region40
        $region39: #{probed_feed_forward.1} parent=35 // pred_region
          %s320 = sand.u32 %s19, 1
          %s321 = scalar_lea.sflag [#allocation6], %s320
          %s322 = sand.u32 %s115, 1
          %s323 = smul.addr %s322, 64
          %s324 = scalar_lea.vmem [#allocation5], %s323
          %s325 = ssub.s32 %s27, 1
          %p326 = scmp.gt.s32.totalorder %s325, 0
          %s327 = scalar_select %p326, %s325, 0
          %s329 = ssub.s32 1024, 1024
          %330 = vsyncadd %s321, %s329
          %s331 = smul.addr %s327, 16
          %s332 = smul.addr %s331, 64
          %s333 = scalar_lea.hbm %s3, %s332
          %s334 = sshll.u32 %s324, 4
          %s335 = int_to_ptr.vmem [resolvable:$true] %s334
          %340 = dma.hbm_to_vmem [thread:$0]  %s333, 1024, %s335, %s321, 64, 64, 4
        $region40: #{probed_feed_forward.1} parent=35 // pred_fallthru
          _
        // Predicated region
        $region41: #{probed_feed_forward.1} parent=35 // pred_check
          %p341 = pneg %p157
        $region42: #{probed_feed_forward.1} parent=35 // pred_check_branch
          %343 = sbr.rel (%p341) target = $region44
        $region43: #{probed_feed_forward.1} parent=35 // pred_region
          %s344 = ssub.s32 %s27, 1
          %p345 = scmp.gt.s32.totalorder %s344, 0
          %s346 = scalar_select %p345, %s344, 0
          %p347 = scmp.lt.s32.totalorder %s346, 2
          %s348 = scalar_select %p347, %s346, 2
          %s349 = scalar_lea.vmem %s4, %s348
          %s350 = ssub.s32 %s27, 1
          %p351 = scmp.gt.s32.totalorder %s350, 0
          %s352 = scalar_select %p351, %s350, 0
        $region44: #{probed_feed_forward.1} parent=35 // pred_fallthru
          _
      $region36: #{probed_feed_forward.1} parent=5 // pred_fallthru
        _
      %p353 = scmp.le.s32.totalorder 1, %s19
      %p354 = scmp.lt.s32.totalorder %s19, 5
      %p355 = pnand %p353, %p354
      %p356 = pneg %p355
      // Predicated region
      $region45: #{probed_feed_forward.1} parent=5 // pred_check
        _
      $region46: #{probed_feed_forward.1} parent=5 // pred_check_branch
        %358 = sbr.rel (%p355) target = $region48
      $region47: #{probed_feed_forward.1} parent=5 // pred_region
        %s359 = ssub.s32 %s19, 1
        // Predicated region
        $region49: #{probed_feed_forward.1} parent=47 // pred_check
          %p360 = pneg %p78
        $region50: #{probed_feed_forward.1} parent=47 // pred_check_branch
          %362 = sbr.rel (%p360) target = $region52
        $region51: #{probed_feed_forward.1} parent=47 // pred_region
          %363 = dma.done [#allocation4], 1024
        $region52: #{probed_feed_forward.1} parent=47 // pred_fallthru
          _
        %s364 = sand.u32 %s24, 1
        %s365 = scalar_lea.sflag [#allocation6], %s364
        %s366 = sand.u32 %s118, 1
        %s367 = smul.addr %s366, 64
        %s368 = scalar_lea.vmem [#allocation5], %s367
        // Predicated region
        $region53: #{probed_feed_forward.1} parent=47 // pred_check
          %p369 = pneg %p131
        $region54: #{probed_feed_forward.1} parent=47 // pred_check_branch
          %371 = sbr.rel (%p369) target = $region56
        $region55: #{probed_feed_forward.1} parent=47 // pred_region
          %372 = dma.done %s365, 1024
        $region56: #{probed_feed_forward.1} parent=47 // pred_fallthru
          _
        // Predicated region
        $region57: #{probed_feed_forward.1} parent=47 // pred_check
          %p373 = pneg %p184
        $region58: #{probed_feed_forward.1} parent=47 // pred_check_branch
          %375 = sbr.rel (%p373) target = $region60
        $region59: #{probed_feed_forward.1} parent=47 // pred_region
          %376 = dma.done [#allocation6], 1024
        $region60: #{probed_feed_forward.1} parent=47 // pred_fallthru
          _
        %p377 = scmp.lt.s32.totalorder %s28, 0
        %s378 = scalar_select %p377, %s28, 0
        %s379 = smul.addr %s378, 8
        %s380 = scalar_lea.vmem %s0, %s379
        %p381 = pneg %p57
        %p382 = pneg %p54
        %p383 = pneg %p78
        %p384 = pneg %p75
        %p385 = pneg %p99
        %p386 = pneg %p96
        %s387 = sand.u32 %s24, 1
        %s388 = scalar_lea.sflag [#allocation6], %s387
        %s389 = sand.u32 %s118, 1
        %s390 = smul.addr %s389, 64
        %s391 = scalar_lea.vmem [#allocation5], %s390
        %p392 = pneg %p131
        %p393 = pneg %p128
        %s394 = ssub.s32 %s29, 1
        %p395 = scmp.gt.s32.totalorder %s394, 0
        %s396 = scalar_select %p395, %s394, 0
        %p397 = scmp.lt.s32.totalorder %s396, 2
        %s398 = scalar_select %p397, %s396, 2
        %s399 = scalar_lea.vmem %s4, %s398
        %p400 = pneg %p163
        %p401 = pneg %p160
        %p402 = pneg %p184
        %p403 = pneg %p181
        %p404 = pneg %p205
        %p405 = pneg %p202
        %p406 = pneg %p231
        %p407 = pneg %p228
        %p408 = scmp.lt.s32.totalorder %s28, 0
        %s409 = scalar_select %p408, %s28, 0
        %s410 = smul.addr %s409, 8
        %s411 = scalar_lea.vmem %s7, %s410
        %p412 = pneg %p259
        %p413 = pneg %p256
        %p414 = scmp.lt.s32.totalorder %s29, 3
        %s415 = scalar_select %p414, %s29, 3
        %p416 = scmp.lt.s32.totalorder %s28, 0
        %s417 = scalar_select %p416, %s28, 0
        %s418 = sadd.s32 %s417, %s415
        %s419 = smul.addr %s418, 8
        %s420 = scalar_lea.vmem %s8, %s419
        %p421 = scmp.lt.s32.totalorder %s28, 0
        %s422 = scalar_select %p421, %s28, 0
        %s423 = smul.addr %s422, 8
        %s424 = scalar_lea.vmem %s0, %s423
        %s425 = ssub.s32 %s29, 1
        %p426 = scmp.gt.s32.totalorder %s425, 0
        %s427 = scalar_select %p426, %s425, 0
        %s428 = ssub.s32 %s29, 1
        %p429 = scmp.gt.s32.totalorder %s428, 0
        %s430 = scalar_select %p429, %s428, 0
        %p431 = scmp.lt.s32.totalorder %s430, 2
        %s432 = scalar_select %p431, %s430, 2
        %s433 = scalar_lea.vmem %s4, %s432
        %s434 = ssub.s32 %s29, 1
        %p435 = scmp.gt.s32.totalorder %s434, 0
        %s436 = scalar_select %p435, %s434, 0
        %p437 = scmp.lt.s32.totalorder %s28, 0
        %s438 = scalar_select %p437, %s28, 0
        %s439 = smul.addr %s438, 8
        %s440 = scalar_lea.vmem %s7, %s439
        %p441 = scmp.lt.s32.totalorder %s29, 3
        %s442 = scalar_select %p441, %s29, 3
        %p443 = scmp.lt.s32.totalorder %s28, 0
        %s444 = scalar_select %p443, %s28, 0
        %s445 = sadd.s32 %s444, %s442
        %s446 = smul.addr %s445, 8
        %s447 = scalar_lea.vmem %s8, %s446
        %p448 = scmp.eq.s32.totalorder %s29, 0
        // Predicated region
        $region61: #{probed_feed_forward.1} parent=47 // pred_check
          %p449 = pneg %p448
        $region62: #{probed_feed_forward.1} parent=47 // pred_check_branch
          %451 = sbr.rel (%p449) target = $region64
        $region63: #{probed_feed_forward.1} parent=47 // pred_region
          %v452 = vld [vmem:[%s424] sm:$0xff]
          %v453 = vld [vmem:[#allocation3] sm:$0xf]
          %v454 = vld [vmem:[#allocation3 + $0x4] sm:$0xf]
          %v455 = vld [vmem:[#allocation3 + $0x8] sm:$0xf]
          %v456 = vld [vmem:[#allocation3 + $0xc] sm:$0xf]
          %v457 = vld [vmem:[#allocation3 + $0x10] sm:$0xf]
          %v458 = vld [vmem:[#allocation3 + $0x14] sm:$0xf]
          %v459 = vld [vmem:[#allocation3 + $0x18] sm:$0xf]
          %v460 = vld [vmem:[#allocation3 + $0x1c] sm:$0xf]
          %v461 = vld [vmem:[#allocation3 + $0x20] sm:$0xf]
          %v462 = vld [vmem:[#allocation3 + $0x24] sm:$0xf]
          %v463 = vld [vmem:[#allocation3 + $0x28] sm:$0xf]
          %v464 = vld [vmem:[#allocation3 + $0x2c] sm:$0xf]
          %v465 = vld [vmem:[#allocation3 + $0x30] sm:$0xf]
          %v466 = vld [vmem:[#allocation3 + $0x34] sm:$0xf]
          %v467 = vld [vmem:[#allocation3 + $0x38] sm:$0xf]
          %v468 = vld [vmem:[#allocation3 + $0x3c] sm:$0xf]
          %v469 = vunpack.c.l.bf16 %v453
          %v470 = vunpack.c.l.bf16 %v454
          %v471 = vunpack.c.l.bf16 %v455
          %v472 = vunpack.c.l.bf16 %v456
          %v473 = vunpack.c.l.bf16 %v457
          %v474 = vunpack.c.l.bf16 %v458
          %v475 = vunpack.c.l.bf16 %v459
          %v476 = vunpack.c.l.bf16 %v460
          %v477 = vunpack.c.l.bf16 %v461
          %v478 = vunpack.c.l.bf16 %v462
          %v479 = vunpack.c.l.bf16 %v463
          %v480 = vunpack.c.l.bf16 %v464
          %v481 = vunpack.c.l.bf16 %v465
          %v482 = vunpack.c.l.bf16 %v466
          %v483 = vunpack.c.l.bf16 %v467
          %v484 = vunpack.c.l.bf16 %v468
          %v485 = vld [vmem:[%s2] sm:$0x1]
          %v487 = vlaneseq
          %v488 = vshrl.u32 %v487, 7
          %v489 = vsub.s32 0, %v488
          %v490 = vrot.slane %v485, %v489
          %492 = vmatprep.subr.mxu0 0.0
          %493 = vmatpush1.msra.mxu0 %v469
          %494 = vmatprep.subr.mxu0 0.0
          %495 = vmatpush1.msra.mxu0 %v470
          %496 = vmatprep.subr.mxu0 0.0
          %497 = vmatpush1.msra.mxu0 %v471
          %498 = vmatprep.subr.mxu0 0.0
          %499 = vmatpush1.msra.mxu0 %v472
          %500 = vmatprep.subr.mxu0 0.0
          %501 = vmatpush1.msra.mxu0 %v473
          %502 = vmatprep.subr.mxu0 0.0
          %503 = vmatpush1.msra.mxu0 %v474
          %504 = vmatprep.subr.mxu0 0.0
          %505 = vmatpush1.msra.mxu0 %v475
          %506 = vmatprep.subr.mxu0 0.0
          %507 = vmatpush1.msra.mxu0 %v476
          %508 = vmatprep.subr.mxu0 0.0
          %509 = vmatpush1.msra.mxu0 %v477
          %510 = vmatprep.subr.mxu0 0.0
          %511 = vmatpush1.msra.mxu0 %v478
          %512 = vmatprep.subr.mxu0 0.0
          %513 = vmatpush1.msra.mxu0 %v479
          %514 = vmatprep.subr.mxu0 0.0
          %515 = vmatpush1.msra.mxu0 %v480
          %516 = vmatprep.subr.mxu0 0.0
          %517 = vmatpush1.msra.mxu0 %v481
          %518 = vmatprep.subr.mxu0 0.0
          %519 = vmatpush1.msra.mxu0 %v482
          %520 = vmatprep.subr.mxu0 0.0
          %521 = vmatpush1.msra.mxu0 %v483
          %522 = vmatprep.subr.mxu0 0.0
          %523 = vmatpush1.msra.mxu0 %v484
          %524 = vmatprep.subr.mxu0 0.0
          %525 = vmatpush1.msra.mxu0 0.0
          %526 = vmatprep.subr.mxu0 0.0
          %527 = vmatpush1.msra.mxu0 0.0
          %528 = vmatprep.subr.mxu0 0.0
          %529 = vmatpush1.msra.mxu0 0.0
          %530 = vmatprep.subr.mxu0 0.0
          %531 = vmatpush1.msra.mxu0 0.0
          %532 = vmatprep.subr.mxu0 0.0
          %533 = vmatpush1.msra.mxu0 0.0
          %534 = vmatprep.subr.mxu0 0.0
          %535 = vmatpush1.msra.mxu0 0.0
          %536 = vmatprep.subr.mxu0 0.0
          %537 = vmatpush1.msra.mxu0 0.0
          %538 = vmatprep.subr.mxu0 0.0
          %539 = vmatpush1.msra.mxu0 0.0
          %540 = vmatprep.subr.mxu0 0.0
          %541 = vmatpush1.msra.mxu0 0.0
          %542 = vmatprep.subr.mxu0 0.0
          %543 = vmatpush1.msra.mxu0 0.0
          %544 = vmatprep.subr.mxu0 0.0
          %545 = vmatpush1.msra.mxu0 0.0
          %546 = vmatprep.subr.mxu0 0.0
          %547 = vmatpush1.msra.mxu0 0.0
          %548 = vmatprep.subr.mxu0 0.0
          %549 = vmatpush1.msra.mxu0 0.0
          %550 = vmatprep.subr.mxu0 0.0
          %551 = vmatpush1.msra.mxu0 0.0
          %552 = vmatprep.subr.mxu0 0.0
          %553 = vmatpush1.msra.mxu0 0.0
          %554 = vmatprep.subr.mxu0 0.0
          %555 = vmatpush1.msra.mxu0 0.0
          %556 = vmatprep.mubr.f32.mxu0 0.0
          %557 = vmatmul.mubr.f32.gmra.mrb[0].mxu0 %v452
          %v558 = vpop.f32.mrb[0].mxu0
          %v559 = vadd.f32 %v490, %v558
          %v560 = vpop.f32.mrb[0].mxu0
          %561 = vdwg.mxu0
          %v562 = vmul.f32 %v559, 0.5
          %v563 = vmul.f32 %v559, 0.70710677
          %v564 = verf.f32.pop %v563
          %v565 = vadd.f32 %v564, 1.0
          %v566 = vmul.f32 %v562, %v565
          %567 = vst [vmem:[#allocation2] sm:$0xff] %v566
        $region64: #{probed_feed_forward.1} parent=47 // pred_fallthru
          _
        %p568 = scmp.gt.s32.totalorder %s29, 0
        // Predicated region
        $region65: #{probed_feed_forward.1} parent=47 // pred_check
          %p569 = pneg %p568
        $region66: #{probed_feed_forward.1} parent=47 // pred_check_branch
          %571 = sbr.rel (%p569) target = $region68
        $region67: #{probed_feed_forward.1} parent=47 // pred_region
          %v572 = vld [vmem:[#allocation2] sm:$0xff]
          %v573 = vld [vmem:[%s368] sm:$0xf]
          %v574 = vld [vmem:[%s368 + $0x4] sm:$0xf]
          %v575 = vld [vmem:[%s368 + $0x8] sm:$0xf]
          %v576 = vld [vmem:[%s368 + $0xc] sm:$0xf]
          %v577 = vld [vmem:[%s368 + $0x10] sm:$0xf]
          %v578 = vld [vmem:[%s368 + $0x14] sm:$0xf]
          %v579 = vld [vmem:[%s368 + $0x18] sm:$0xf]
          %v580 = vld [vmem:[%s368 + $0x1c] sm:$0xf]
          %v581 = vld [vmem:[%s368 + $0x20] sm:$0xf]
          %v582 = vld [vmem:[%s368 + $0x24] sm:$0xf]
          %v583 = vld [vmem:[%s368 + $0x28] sm:$0xf]
          %v584 = vld [vmem:[%s368 + $0x2c] sm:$0xf]
          %v585 = vld [vmem:[%s368 + $0x30] sm:$0xf]
          %v586 = vld [vmem:[%s368 + $0x34] sm:$0xf]
          %v587 = vld [vmem:[%s368 + $0x38] sm:$0xf]
          %v588 = vld [vmem:[%s368 + $0x3c] sm:$0xf]
          %v589 = vunpack.c.l.bf16 %v573
          %v590 = vunpack.c.l.bf16 %v574
          %v591 = vunpack.c.l.bf16 %v575
          %v592 = vunpack.c.l.bf16 %v576
          %v593 = vunpack.c.l.bf16 %v577
          %v594 = vunpack.c.l.bf16 %v578
          %v595 = vunpack.c.l.bf16 %v579
          %v596 = vunpack.c.l.bf16 %v580
          %v597 = vunpack.c.l.bf16 %v581
          %v598 = vunpack.c.l.bf16 %v582
          %v599 = vunpack.c.l.bf16 %v583
          %v600 = vunpack.c.l.bf16 %v584
          %v601 = vunpack.c.l.bf16 %v585
          %v602 = vunpack.c.l.bf16 %v586
          %v603 = vunpack.c.l.bf16 %v587
          %v604 = vunpack.c.l.bf16 %v588
          %v605 = vld [vmem:[%s433] sm:$0x1]
          %v607 = vlaneseq
          %v608 = vshrl.u32 %v607, 7
          %v609 = vsub.s32 0, %v608
          %v610 = vrot.slane %v605, %v609
          %612 = vmatprep.subr.mxu0 0.0
          %613 = vmatpush1.msra.mxu0 %v589
          %614 = vmatprep.subr.mxu0 0.0
          %615 = vmatpush1.msra.mxu0 %v590
          %616 = vmatprep.subr.mxu0 0.0
          %617 = vmatpush1.msra.mxu0 %v591
          %618 = vmatprep.subr.mxu0 0.0
          %619 = vmatpush1.msra.mxu0 %v592
          %620 = vmatprep.subr.mxu0 0.0
          %621 = vmatpush1.msra.mxu0 %v593
          %622 = vmatprep.subr.mxu0 0.0
          %623 = vmatpush1.msra.mxu0 %v594
          %624 = vmatprep.subr.mxu0 0.0
          %625 = vmatpush1.msra.mxu0 %v595
          %626 = vmatprep.subr.mxu0 0.0
          %627 = vmatpush1.msra.mxu0 %v596
          %628 = vmatprep.subr.mxu0 0.0
          %629 = vmatpush1.msra.mxu0 %v597
          %630 = vmatprep.subr.mxu0 0.0
          %631 = vmatpush1.msra.mxu0 %v598
          %632 = vmatprep.subr.mxu0 0.0
          %633 = vmatpush1.msra.mxu0 %v599
          %634 = vmatprep.subr.mxu0 0.0
          %635 = vmatpush1.msra.mxu0 %v600
          %636 = vmatprep.subr.mxu0 0.0
          %637 = vmatpush1.msra.mxu0 %v601
          %638 = vmatprep.subr.mxu0 0.0
          %639 = vmatpush1.msra.mxu0 %v602
          %640 = vmatprep.subr.mxu0 0.0
          %641 = vmatpush1.msra.mxu0 %v603
          %642 = vmatprep.subr.mxu0 0.0
          %643 = vmatpush1.msra.mxu0 %v604
          %644 = vmatprep.subr.mxu0 0.0
          %645 = vmatpush1.msra.mxu0 0.0
          %646 = vmatprep.subr.mxu0 0.0
          %647 = vmatpush1.msra.mxu0 0.0
          %648 = vmatprep.subr.mxu0 0.0
          %649 = vmatpush1.msra.mxu0 0.0
          %650 = vmatprep.subr.mxu0 0.0
          %651 = vmatpush1.msra.mxu0 0.0
          %652 = vmatprep.subr.mxu0 0.0
          %653 = vmatpush1.msra.mxu0 0.0
          %654 = vmatprep.subr.mxu0 0.0
          %655 = vmatpush1.msra.mxu0 0.0
          %656 = vmatprep.subr.mxu0 0.0
          %657 = vmatpush1.msra.mxu0 0.0
          %658 = vmatprep.subr.mxu0 0.0
          %659 = vmatpush1.msra.mxu0 0.0
          %660 = vmatprep.subr.mxu0 0.0
          %661 = vmatpush1.msra.mxu0 0.0
          %662 = vmatprep.subr.mxu0 0.0
          %663 = vmatpush1.msra.mxu0 0.0
          %664 = vmatprep.subr.mxu0 0.0
          %665 = vmatpush1.msra.mxu0 0.0
          %666 = vmatprep.subr.mxu0 0.0
          %667 = vmatpush1.msra.mxu0 0.0
          %668 = vmatprep.subr.mxu0 0.0
          %669 = vmatpush1.msra.mxu0 0.0
          %670 = vmatprep.subr.mxu0 0.0
          %671 = vmatpush1.msra.mxu0 0.0
          %672 = vmatprep.subr.mxu0 0.0
          %673 = vmatpush1.msra.mxu0 0.0
          %674 = vmatprep.subr.mxu0 0.0
          %675 = vmatpush1.msra.mxu0 0.0
          %676 = vmatprep.mubr.f32.mxu0 0.0
          %677 = vmatmul.mubr.f32.gmra.mrb[0].mxu0 %v572
          %v678 = vpop.f32.mrb[0].mxu0
          %v679 = vadd.f32 %v610, %v678
          %v680 = vpop.f32.mrb[0].mxu0
          %681 = vdwg.mxu0
          %v682 = vmul.f32 %v679, 0.5
          %v683 = vmul.f32 %v679, 0.70710677
          %v684 = verf.f32.pop %v683
          %v685 = vadd.f32 %v684, 1.0
          %v686 = vmul.f32 %v682, %v685
          %687 = vst [vmem:[#allocation2] sm:$0xff] %v686
        $region68: #{probed_feed_forward.1} parent=47 // pred_fallthru
          _
        %v688 = vld [vmem:[#allocation2] sm:$0xff]
        %689 = vst [vmem:[%s447] sm:$0xff] %v688
        %p690 = scmp.eq.s32.totalorder %s29, 3
        // Predicated region
        $region69: #{probed_feed_forward.1} parent=47 // pred_check
          %p691 = pneg %p690
        $region70: #{probed_feed_forward.1} parent=47 // pred_check_branch
          %693 = sbr.rel (%p691) target = $region72
        $region71: #{probed_feed_forward.1} parent=47 // pred_region
          %v694 = vld [vmem:[#allocation2] sm:$0xff]
          %v695 = vld [vmem:[#allocation7] sm:$0xf]
          %v696 = vld [vmem:[#allocation7 + $0x4] sm:$0xf]
          %v697 = vld [vmem:[#allocation7 + $0x8] sm:$0xf]
          %v698 = vld [vmem:[#allocation7 + $0xc] sm:$0xf]
          %v699 = vld [vmem:[#allocation7 + $0x10] sm:$0xf]
          %v700 = vld [vmem:[#allocation7 + $0x14] sm:$0xf]
          %v701 = vld [vmem:[#allocation7 + $0x18] sm:$0xf]
          %v702 = vld [vmem:[#allocation7 + $0x1c] sm:$0xf]
          %v703 = vld [vmem:[#allocation7 + $0x20] sm:$0xf]
          %v704 = vld [vmem:[#allocation7 + $0x24] sm:$0xf]
          %v705 = vld [vmem:[#allocation7 + $0x28] sm:$0xf]
          %v706 = vld [vmem:[#allocation7 + $0x2c] sm:$0xf]
          %v707 = vld [vmem:[#allocation7 + $0x30] sm:$0xf]
          %v708 = vld [vmem:[#allocation7 + $0x34] sm:$0xf]
          %v709 = vld [vmem:[#allocation7 + $0x38] sm:$0xf]
          %v710 = vld [vmem:[#allocation7 + $0x3c] sm:$0xf]
          %v711 = vunpack.c.l.bf16 %v695
          %v712 = vunpack.c.l.bf16 %v696
          %v713 = vunpack.c.l.bf16 %v697
          %v714 = vunpack.c.l.bf16 %v698
          %v715 = vunpack.c.l.bf16 %v699
          %v716 = vunpack.c.l.bf16 %v700
          %v717 = vunpack.c.l.bf16 %v701
          %v718 = vunpack.c.l.bf16 %v702
          %v719 = vunpack.c.l.bf16 %v703
          %v720 = vunpack.c.l.bf16 %v704
          %v721 = vunpack.c.l.bf16 %v705
          %v722 = vunpack.c.l.bf16 %v706
          %v723 = vunpack.c.l.bf16 %v707
          %v724 = vunpack.c.l.bf16 %v708
          %v725 = vunpack.c.l.bf16 %v709
          %v726 = vunpack.c.l.bf16 %v710
          %v727 = vld [vmem:[%s6] sm:$0x1]
          %v729 = vlaneseq
          %v730 = vshrl.u32 %v729, 7
          %v731 = vsub.s32 0, %v730
          %v732 = vrot.slane %v727, %v731
          %734 = vmatprep.subr.mxu0 0.0
          %735 = vmatpush1.msra.mxu0 %v711
          %736 = vmatprep.subr.mxu0 0.0
          %737 = vmatpush1.msra.mxu0 %v712
          %738 = vmatprep.subr.mxu0 0.0
          %739 = vmatpush1.msra.mxu0 %v713
          %740 = vmatprep.subr.mxu0 0.0
          %741 = vmatpush1.msra.mxu0 %v714
          %742 = vmatprep.subr.mxu0 0.0
          %743 = vmatpush1.msra.mxu0 %v715
          %744 = vmatprep.subr.mxu0 0.0
          %745 = vmatpush1.msra.mxu0 %v716
          %746 = vmatprep.subr.mxu0 0.0
          %747 = vmatpush1.msra.mxu0 %v717
          %748 = vmatprep.subr.mxu0 0.0
          %749 = vmatpush1.msra.mxu0 %v718
          %750 = vmatprep.subr.mxu0 0.0
          %751 = vmatpush1.msra.mxu0 %v719
          %752 = vmatprep.subr.mxu0 0.0
          %753 = vmatpush1.msra.mxu0 %v720
          %754 = vmatprep.subr.mxu0 0.0
          %755 = vmatpush1.msra.mxu0 %v721
          %756 = vmatprep.subr.mxu0 0.0
          %757 = vmatpush1.msra.mxu0 %v722
          %758 = vmatprep.subr.mxu0 0.0
          %759 = vmatpush1.msra.mxu0 %v723
          %760 = vmatprep.subr.mxu0 0.0
          %761 = vmatpush1.msra.mxu0 %v724
          %762 = vmatprep.subr.mxu0 0.0
          %763 = vmatpush1.msra.mxu0 %v725
          %764 = vmatprep.subr.mxu0 0.0
          %765 = vmatpush1.msra.mxu0 %v726
          %766 = vmatprep.subr.mxu0 0.0
          %767 = vmatpush1.msra.mxu0 0.0
          %768 = vmatprep.subr.mxu0 0.0
          %769 = vmatpush1.msra.mxu0 0.0
          %770 = vmatprep.subr.mxu0 0.0
          %771 = vmatpush1.msra.mxu0 0.0
          %772 = vmatprep.subr.mxu0 0.0
          %773 = vmatpush1.msra.mxu0 0.0
          %774 = vmatprep.subr.mxu0 0.0
          %775 = vmatpush1.msra.mxu0 0.0
          %776 = vmatprep.subr.mxu0 0.0
          %777 = vmatpush1.msra.mxu0 0.0
          %778 = vmatprep.subr.mxu0 0.0
          %779 = vmatpush1.msra.mxu0 0.0
          %780 = vmatprep.subr.mxu0 0.0
          %781 = vmatpush1.msra.mxu0 0.0
          %782 = vmatprep.subr.mxu0 0.0
          %783 = vmatpush1.msra.mxu0 0.0
          %784 = vmatprep.subr.mxu0 0.0
          %785 = vmatpush1.msra.mxu0 0.0
          %786 = vmatprep.subr.mxu0 0.0
          %787 = vmatpush1.msra.mxu0 0.0
          %788 = vmatprep.subr.mxu0 0.0
          %789 = vmatpush1.msra.mxu0 0.0
          %790 = vmatprep.subr.mxu0 0.0
          %791 = vmatpush1.msra.mxu0 0.0
          %792 = vmatprep.subr.mxu0 0.0
          %793 = vmatpush1.msra.mxu0 0.0
          %794 = vmatprep.subr.mxu0 0.0
          %795 = vmatpush1.msra.mxu0 0.0
          %796 = vmatprep.subr.mxu0 0.0
          %797 = vmatpush1.msra.mxu0 0.0
          %798 = vmatprep.mubr.f32.mxu0 0.0
          %799 = vmatmul.mubr.f32.gmra.mrb[0].mxu0 %v694
          %v800 = vpop.f32.mrb[0].mxu0
          %v801 = vadd.f32 %v732, %v800
          %v802 = vpop.f32.mrb[0].mxu0
          %803 = vdwg.mxu0
          %804 = vst [vmem:[%s440] sm:$0xff] %v801
        $region72: #{probed_feed_forward.1} parent=47 // pred_fallthru
          _
        %p805 = scmp.lt.s32.totalorder %s28, 0
        %s806 = scalar_select %p805, %s28, 0
        %s807 = smul.addr %s806, 8
        %s808 = scalar_lea.vmem %s7, %s807
        %p809 = scmp.lt.s32.totalorder %s29, 3
        %s810 = scalar_select %p809, %s29, 3
        %p811 = scmp.lt.s32.totalorder %s28, 0
        %s812 = scalar_select %p811, %s28, 0
        %s813 = sadd.s32 %s812, %s810
        %s814 = smul.addr %s813, 8
        %s815 = scalar_lea.vmem %s8, %s814
        // Predicated region
        $region73: #{probed_feed_forward.1} parent=47 // pred_check
          %p816 = pneg %p228
        $region74: #{probed_feed_forward.1} parent=47 // pred_check_branch
          %818 = sbr.rel (%p816) target = $region76
        $region75: #{probed_feed_forward.1} parent=47 // pred_region
          _
        $region76: #{probed_feed_forward.1} parent=47 // pred_fallthru
          _
        // Predicated region
        $region77: #{probed_feed_forward.1} parent=47 // pred_check
          %p819 = pneg %p256
        $region78: #{probed_feed_forward.1} parent=47 // pred_check_branch
          %821 = sbr.rel (%p819) target = $region80
        $region79: #{probed_feed_forward.1} parent=47 // pred_region
          _
        $region80: #{probed_feed_forward.1} parent=47 // pred_fallthru
          _
        // Predicated region
        $region81: #{probed_feed_forward.1} parent=47 // pred_check
          %p822 = pneg %p228
        $region82: #{probed_feed_forward.1} parent=47 // pred_check_branch
          %824 = sbr.rel (%p822) target = $region84
        $region83: #{probed_feed_forward.1} parent=47 // pred_region
          %p825 = scmp.lt.s32.totalorder %s28, 0
          %s826 = scalar_select %p825, %s28, 0
          %s827 = smul.addr %s826, 8
          %s828 = scalar_lea.vmem %s7, %s827
        $region84: #{probed_feed_forward.1} parent=47 // pred_fallthru
          _
      $region48: #{probed_feed_forward.1} parent=5 // pred_fallthru
        _
      %p829 = scmp.le.s32.totalorder 2, %s19
      // Predicated region
      $region85: #{probed_feed_forward.1} parent=5 // pred_check
        %p830 = pneg %p829
      $region86: #{probed_feed_forward.1} parent=5 // pred_check_branch
        %832 = sbr.rel (%p830) target = $region88
      $region87: #{probed_feed_forward.1} parent=5 // pred_region
        %s833 = ssub.s32 %s19, 2
        // Predicated region
        $region89: #{probed_feed_forward.1} parent=87 // pred_check
          %p834 = pneg %p262
        $region90: #{probed_feed_forward.1} parent=87 // pred_check_branch
          %836 = sbr.rel (%p834) target = $region92
        $region91: #{probed_feed_forward.1} parent=87 // pred_region
          %p837 = scmp.lt.s32.totalorder %s31, 3
          %s838 = scalar_select %p837, %s31, 3
          %p839 = scmp.lt.s32.totalorder %s30, 0
          %s840 = scalar_select %p839, %s30, 0
          %s841 = sadd.s32 %s840, %s838
          %s842 = smul.addr %s841, 8
          %s843 = scalar_lea.vmem %s8, %s842
        $region92: #{probed_feed_forward.1} parent=87 // pred_fallthru
          _
      $region88: #{probed_feed_forward.1} parent=5 // pred_fallthru
        _
    $region6: #{probed_feed_forward.1} parent=1 // loop_footer
      %s23 = sadd.s32 1, %s19
    $region7: #{probed_feed_forward.1} parent=1 // loop_footer_branch
      %18 = sbr.rel target = $region3
    $region8: #{probed_feed_forward.1} parent=1 // loop_exit
      _
    %844 = vsyncpa [#allocation4], 1
    %s845 = scalar_lea.sflag [#allocation4], 1
    %846 = vsyncpa %s845, 1
    %847 = vsyncpa [#allocation6], 1
    %s848 = scalar_lea.sflag [#allocation6], 1
    %849 = vsyncpa %s848, 1

</llo_original>
